<compile_context>
chip_gen: v5e
topology: v5e:2x2
jax: 0.10.0
libtpu: 0.0.40
codegen_flags: <defaults>
</compile_context>

<pallas_src>
import jax
import jax.numpy as jnp
from jax.experimental import pallas as pl
from jax.experimental.pallas import tpu as pltpu


def _round_up(x, m):
    return ((x + m - 1) // m) * m


def _cdiv(a, b):
    return (a + b - 1) // b


def toynet_kernel(x_ref, w1_ref, b1_ref, w2_ref, b2_ref, w3_ref, b3_ref, out_ref):
    # Layer 1: (TILE_B, D)bf16 @ (D, 8)bf16, f32 MXU accumulation; bias/ReLU f32.
    h1 = jnp.dot(x_ref[...], w1_ref[...], preferred_element_type=jnp.float32)
    h1 = jnp.maximum(h1 + b1_ref[...], 0.0)
    # Layer 2: bf16 operands (halves vmatmul pushes), f32 accumulation.
    h2 = jnp.dot(h1.astype(jnp.bfloat16), w2_ref[...],
                 preferred_element_type=jnp.float32)
    h2 = jnp.maximum(h2 + b2_ref[...], 0.0)
    # Layer 3: (TILE_B, 8)bf16 @ (8, C)bf16 -> f32; full-extent (unpadded) store.
    out = jnp.dot(h2.astype(jnp.bfloat16), w3_ref[...],
                  preferred_element_type=jnp.float32)
    out_ref[...] = (out + b3_ref[...]).astype(out_ref.dtype)


def _dimension_semantics(grid_len):
    """CORE_PARALLEL only where it actually helps (v7x, >=2 tiles)."""
    try:
        kind = jax.devices()[0].device_kind.lower()
    except Exception:
        kind = ""
    if grid_len >= 2 and ("v7" in kind or "7x" in kind):
        return (pltpu.CORE_PARALLEL,)
    return ("parallel",)


def toynet_forward(x_nchw, params, tile_b=4096):
    """x_nchw: (B, C, H, W). params: dict of pre-transposed (in, out) weights + biases."""
    B = x_nchw.shape[0]
    x_flat = x_nchw.reshape(B, -1)  # == torch x.view(x.size(0), -1)
    D = x_flat.shape[1]

    # bf16 matmul operands (f32 accumulation inside the kernel); biases stay f32.
    x_flat = x_flat.astype(jnp.bfloat16)
    w1 = params["w1"].astype(jnp.bfloat16)
    w2 = params["w2"].astype(jnp.bfloat16)
    w3 = params["w3"].astype(jnp.bfloat16)
    b1 = params["b1"].astype(jnp.float32)
    b2 = params["b2"].astype(jnp.float32)
    b3 = params["b3"].astype(jnp.float32)
    num_classes = w3.shape[1]

    # --- tile sizing: derive a cap from a per-tile VMEM budget (double-buffered
    # bf16 x block + double-buffered f32 out block), then split the batch into
    # equal tiles so padding waste stays < 16 rows per tile.
    QUANT = 16  # bf16 sublane packing quantum (also satisfies f32's 8)
    VMEM_BUDGET = 20 * 1024 * 1024  # headroom under the 32 MiB scoped limit
    bytes_per_row = 2 * (D * 2) + 2 * (num_classes * 4)
    tile_cap = max(QUANT, (VMEM_BUDGET // bytes_per_row) // QUANT * QUANT)
    tile_cap = min(tile_cap, _round_up(tile_b, QUANT))

    B_q = _round_up(B, QUANT)
    n_tiles = _cdiv(B_q, tile_cap)
    tile = _round_up(_cdiv(B_q, n_tiles), QUANT)
    B_pad = n_tiles * tile
    if B_pad != B:
        x_flat = jnp.pad(x_flat, ((0, B_pad - B), (0, 0)))

    grid = (n_tiles,)

    out_padded = pl.pallas_call(
        toynet_kernel,
        out_shape=jax.ShapeDtypeStruct((B_pad, num_classes), jnp.float32),
        grid=grid,
        in_specs=[
            pl.BlockSpec((tile, D), lambda i: (i, 0)),            # x: streamed bf16 tiles
            pl.BlockSpec((D, 8), lambda i: (0, 0)),               # w1 (bf16, VMEM-resident)
            pl.BlockSpec((1, 8), lambda i: (0, 0)),               # b1 (f32)
            pl.BlockSpec((8, 8), lambda i: (0, 0)),               # w2 (bf16)
            pl.BlockSpec((1, 8), lambda i: (0, 0)),               # b2 (f32)
            pl.BlockSpec((8, num_classes), lambda i: (0, 0)),     # w3 (bf16, full extent)
            pl.BlockSpec((1, num_classes), lambda i: (0, 0)),     # b3 (f32, full extent)
        ],
        out_specs=pl.BlockSpec((tile, num_classes), lambda i: (i, 0)),
        compiler_params=pltpu.CompilerParams(
            dimension_semantics=_dimension_semantics(n_tiles),
            vmem_limit_bytes=32 * 1024 * 1024,
        ),
    )(x_flat, w1, b1, w2, b2, w3, b3)

    # Padded rows hold garbage (bias+ReLU of zero rows) -- slice them off here.
    return out_padded[:B, :]


def init_params(in_planes, num_classes, key):
    """Deterministic synthetic init; weights stored as (in, out) = W_pytorch.T."""
    k1, k2, k3, k4, k5, k6 = jax.random.split(key, 6)
    s1 = 1.0 / jnp.sqrt(in_planes)
    s2 = 1.0 / jnp.sqrt(8.0)
    return {
        "w1": jax.random.uniform(k1, (in_planes, 8), jnp.float32, -s1, s1),
        "b1": jax.random.uniform(k2, (1, 8), jnp.float32, -s1, s1),
        "w2": jax.random.uniform(k3, (8, 8), jnp.float32, -s2, s2),
        "b2": jax.random.uniform(k4, (1, 8), jnp.float32, -s2, s2),
        "w3": jax.random.uniform(k5, (8, num_classes), jnp.float32, -s2, s2),
        "b3": jax.random.uniform(k6, (1, num_classes), jnp.float32, -s2, s2),
    }


if __name__ == "__main__":
    # image_size = (C, H, W) = (4, 16, 16) -> in_planes = 1024; num_classes = 10
    B, C, H, W = 2, 4, 16, 16
    num_classes = 10
    in_planes = C * H * W

    key = jax.random.PRNGKey(0)
    k_x, k_p = jax.random.split(key)
    x = jax.random.normal(k_x, (B, C, H, W), jnp.float32)
    params = init_params(in_planes, num_classes, k_p)

    out = toynet_forward(x, params)
    jax.block_until_ready(out)
    assert out.shape == (B, num_classes)

    # Pure-JAX reference computing the SAME math (bf16 MXU operands, f32 accum).
    x_flat = x.reshape(B, -1).astype(jnp.bfloat16)
    w1b = params["w1"].astype(jnp.bfloat16)
    w2b = params["w2"].astype(jnp.bfloat16)
    w3b = params["w3"].astype(jnp.bfloat16)
    ref = jnp.maximum(
        jnp.dot(x_flat, w1b, preferred_element_type=jnp.float32) + params["b1"], 0.0)
    ref = jnp.maximum(
        jnp.dot(ref.astype(jnp.bfloat16), w2b, preferred_element_type=jnp.float32)
        + params["b2"], 0.0)
    ref = (jnp.dot(ref.astype(jnp.bfloat16), w3b, preferred_element_type=jnp.float32)
           + params["b3"])
    assert jnp.allclose(out, ref, atol=1e-2, rtol=1e-2), "mismatch vs reference"

    print("KERNEL_OK")
</pallas_src>

<mosaic_0001>
module attributes {stable_mosaic.version = 11 : i64} {
  func.func @toynet_kernel(%arg0: i32, %arg1: memref<16x1024xbf16, #tpu.memory_space<vmem>>, %arg2: memref<1024x8xbf16, #tpu.memory_space<vmem>>, %arg3: memref<1x8xf32, #tpu.memory_space<vmem>>, %arg4: memref<8x8xbf16, #tpu.memory_space<vmem>>, %arg5: memref<1x8xf32, #tpu.memory_space<vmem>>, %arg6: memref<8x10xbf16, #tpu.memory_space<vmem>>, %arg7: memref<1x10xf32, #tpu.memory_space<vmem>>, %arg8: memref<16x10xf32, #tpu.memory_space<vmem>>) attributes {dimension_semantics = [#tpu.dimension_semantics<parallel>], iteration_bounds = array<i64: 1>, scalar_prefetch = 0 : i64, scratch_operands = 0 : i64, tpu.core_type = #tpu.core_type<tc>, window_params = [{transform_indices = @transform_0, window_bounds = array<i64: 16, 1024>}, {pipeline_mode = #tpu.pipeline_mode<synchronous>, transform_indices = @transform_1, window_bounds = array<i64: 1024, 8>}, {pipeline_mode = #tpu.pipeline_mode<synchronous>, transform_indices = @transform_2, window_bounds = array<i64: 1, 8>}, {pipeline_mode = #tpu.pipeline_mode<synchronous>, transform_indices = @transform_3, window_bounds = array<i64: 8, 8>}, {pipeline_mode = #tpu.pipeline_mode<synchronous>, transform_indices = @transform_4, window_bounds = array<i64: 1, 8>}, {pipeline_mode = #tpu.pipeline_mode<synchronous>, transform_indices = @transform_5, window_bounds = array<i64: 8, 10>}, {pipeline_mode = #tpu.pipeline_mode<synchronous>, transform_indices = @transform_6, window_bounds = array<i64: 1, 10>}, {transform_indices = @transform_7, window_bounds = array<i64: 16, 10>}]} {
    %c0 = arith.constant 0 : index
    %c0_0 = arith.constant 0 : index
    %0 = vector.load %arg1[%c0, %c0_0] : memref<16x1024xbf16, #tpu.memory_space<vmem>>, vector<16x1024xbf16>
    %c0_1 = arith.constant 0 : index
    %c0_2 = arith.constant 0 : index
    %1 = vector.load %arg2[%c0_1, %c0_2] : memref<1024x8xbf16, #tpu.memory_space<vmem>>, vector<1024x8xbf16>
    %cst = arith.constant dense<0.000000e+00> : vector<16x8xf32>
    %2 = tpu.matmul %0, %1, %cst {dimension_numbers = #tpu.dot_dimension_numbers<[1], [0], [0], [1], [0, 0, 1, 1], [], []>} : vector<16x1024xbf16>, vector<1024x8xbf16>, vector<16x8xf32> -> vector<16x8xf32>
    %c0_3 = arith.constant 0 : index
    %c0_4 = arith.constant 0 : index
    %3 = vector.load %arg3[%c0_3, %c0_4] : memref<1x8xf32, #tpu.memory_space<vmem>>, vector<1x8xf32>
    %4 = vector.broadcast %3 : vector<1x8xf32> to vector<16x8xf32>
    %5 = arith.addf %2, %4 : vector<16x8xf32>
    %cst_5 = arith.constant 0.000000e+00 : f32
    %6 = vector.broadcast %cst_5 : f32 to vector<16x8xf32>
    %7 = arith.maximumf %5, %6 : vector<16x8xf32>
    %8 = arith.truncf %7 : vector<16x8xf32> to vector<16x8xbf16>
    %c0_6 = arith.constant 0 : index
    %c0_7 = arith.constant 0 : index
    %9 = vector.load %arg4[%c0_6, %c0_7] : memref<8x8xbf16, #tpu.memory_space<vmem>>, vector<8x8xbf16>
    %cst_8 = arith.constant dense<0.000000e+00> : vector<16x8xf32>
    %10 = tpu.matmul %8, %9, %cst_8 {dimension_numbers = #tpu.dot_dimension_numbers<[1], [0], [0], [1], [0, 0, 1, 1], [], []>} : vector<16x8xbf16>, vector<8x8xbf16>, vector<16x8xf32> -> vector<16x8xf32>
    %c0_9 = arith.constant 0 : index
    %c0_10 = arith.constant 0 : index
    %11 = vector.load %arg5[%c0_9, %c0_10] : memref<1x8xf32, #tpu.memory_space<vmem>>, vector<1x8xf32>
    %12 = vector.broadcast %11 : vector<1x8xf32> to vector<16x8xf32>
    %13 = arith.addf %10, %12 : vector<16x8xf32>
    %cst_11 = arith.constant 0.000000e+00 : f32
    %14 = vector.broadcast %cst_11 : f32 to vector<16x8xf32>
    %15 = arith.maximumf %13, %14 : vector<16x8xf32>
    %16 = arith.truncf %15 : vector<16x8xf32> to vector<16x8xbf16>
    %c0_12 = arith.constant 0 : index
    %c0_13 = arith.constant 0 : index
    %17 = vector.load %arg6[%c0_12, %c0_13] : memref<8x10xbf16, #tpu.memory_space<vmem>>, vector<8x10xbf16>
    %cst_14 = arith.constant dense<0.000000e+00> : vector<16x10xf32>
    %18 = tpu.matmul %16, %17, %cst_14 {dimension_numbers = #tpu.dot_dimension_numbers<[1], [0], [0], [1], [0, 0, 1, 1], [], []>} : vector<16x8xbf16>, vector<8x10xbf16>, vector<16x10xf32> -> vector<16x10xf32>
    %c0_15 = arith.constant 0 : index
    %c0_16 = arith.constant 0 : index
    %19 = vector.load %arg7[%c0_15, %c0_16] : memref<1x10xf32, #tpu.memory_space<vmem>>, vector<1x10xf32>
    %20 = vector.broadcast %19 : vector<1x10xf32> to vector<16x10xf32>
    %21 = arith.addf %18, %20 : vector<16x10xf32>
    %c0_17 = arith.constant 0 : index
    %c0_18 = arith.constant 0 : index
    %22 = vector.load %arg8[%c0_17, %c0_18] : memref<16x10xf32, #tpu.memory_space<vmem>>, vector<16x10xf32>
    tpu.vector_store %arg8[%c0_17, %c0_18], %21 {strides = array<i32>} : memref<16x10xf32, #tpu.memory_space<vmem>>, vector<16x10xf32>,
    return
  }
  func.func @transform_0(%arg0: i32) -> (i32, i32) {
    %c0_i32 = arith.constant 0 : i32
    %c0_i32_0 = arith.constant 0 : i32
    return %arg0, %c0_i32 : i32, i32
  }
  func.func @transform_1(%arg0: i32) -> (i32, i32) {
    %c0_i32 = arith.constant 0 : i32
    %c0_i32_0 = arith.constant 0 : i32
    %c0_i32_1 = arith.constant 0 : i32
    return %c0_i32, %c0_i32_0 : i32, i32
  }
  func.func @transform_2(%arg0: i32) -> (i32, i32) {
    %c0_i32 = arith.constant 0 : i32
    %c0_i32_0 = arith.constant 0 : i32
    %c0_i32_1 = arith.constant 0 : i32
    return %c0_i32, %c0_i32_0 : i32, i32
  }
  func.func @transform_3(%arg0: i32) -> (i32, i32) {
    %c0_i32 = arith.constant 0 : i32
    %c0_i32_0 = arith.constant 0 : i32
    %c0_i32_1 = arith.constant 0 : i32
    return %c0_i32, %c0_i32_0 : i32, i32
  }
  func.func @transform_4(%arg0: i32) -> (i32, i32) {
    %c0_i32 = arith.constant 0 : i32
    %c0_i32_0 = arith.constant 0 : i32
    %c0_i32_1 = arith.constant 0 : i32
    return %c0_i32, %c0_i32_0 : i32, i32
  }
  func.func @transform_5(%arg0: i32) -> (i32, i32) {
    %c0_i32 = arith.constant 0 : i32
    %c0_i32_0 = arith.constant 0 : i32
    %c0_i32_1 = arith.constant 0 : i32
    return %c0_i32, %c0_i32_0 : i32, i32
  }
  func.func @transform_6(%arg0: i32) -> (i32, i32) {
    %c0_i32 = arith.constant 0 : i32
    %c0_i32_0 = arith.constant 0 : i32
    %c0_i32_1 = arith.constant 0 : i32
    return %c0_i32, %c0_i32_0 : i32, i32
  }
  func.func @transform_7(%arg0: i32) -> (i32, i32) {
    %c0_i32 = arith.constant 0 : i32
    %c0_i32_0 = arith.constant 0 : i32
    return %arg0, %c0_i32 : i32, i32
  }
}

</mosaic_0001>

<llo_original>
// kernel: tpu_custom_call.1
$region0: #{tpu_custom_call.1}
  #allocation0 [shape = 'u32[]', space=smem, size = 0x4, offset = 0x4, fixed_abs, tag = 'smem constant byte address 0x4 - core index']
  #allocation1 [shape = 'u32[72,128]{1,0:T(1,128)}', space=vmem, size = 0x9000, scoped, tag = 'internal scratch']
  %s0 = inlined_call_operand.vmem [shape: bf16[16,1024], index: 0, kind: input, shape index: {}]
  %s1 = inlined_call_operand.vmem [shape: bf16[1024,8], index: 1, kind: input, shape index: {}]
  %s2 = inlined_call_operand.vmem [shape: f32[1,8], index: 2, kind: input, shape index: {}]
  %s3 = inlined_call_operand.vmem [shape: bf16[8,8], index: 3, kind: input, shape index: {}]
  %s4 = inlined_call_operand.vmem [shape: f32[1,8], index: 4, kind: input, shape index: {}]
  %s5 = inlined_call_operand.vmem [shape: bf16[8,10], index: 5, kind: input, shape index: {}]
  %s6 = inlined_call_operand.vmem [shape: f32[1,10], index: 6, kind: input, shape index: {}]
  %s7 = inlined_call_operand.hbm [shape: f32[16,10], index: 7, kind: output, shape index: {}]
  %s8 = sld [smem:[#allocation0]]
  $region38: #{tpu_custom_call.1} parent=0
    _
  %s10 = ssub.s32 1, %s8
  %s11 = scalar_select 0, %s10, %s8
  $region1: #{tpu_custom_call.1} parent=0
    #allocation2 [shape = 'u8[8192]{0}', space=vmem, size = 0x2000, scoped, tag = 'output window, operand 0, single buffered']
    #allocation3 [shape = 's32[1]{0}', space=sflag, size = 0x4, scoped, tag = 'scoped memory for tpu_custom_call.1']
    %12 = vsyncpa [#allocation3], 0
    // Predicated region
    $region2: #{tpu_custom_call.1} parent=1 // pred_check
      _
    $region3: #{tpu_custom_call.1} parent=1 // pred_check_branch
      %14 = sbr.rel (0) target = $region5
    $region4: #{tpu_custom_call.1} parent=1 // pred_region
      _
    $region5: #{tpu_custom_call.1} parent=1 // pred_fallthru
      _
    // Predicated region
    $region6: #{tpu_custom_call.1} parent=1 // pred_check
      _
    $region7: #{tpu_custom_call.1} parent=1 // pred_check_branch
      %16 = sbr.rel (0) target = $region9
    $region8: #{tpu_custom_call.1} parent=1 // pred_region
      _
    $region9: #{tpu_custom_call.1} parent=1 // pred_fallthru
      _
    // Predicated region
    $region10: #{tpu_custom_call.1} parent=1 // pred_check
      _
    $region11: #{tpu_custom_call.1} parent=1 // pred_check_branch
      %18 = sbr.rel (0) target = $region13
    $region12: #{tpu_custom_call.1} parent=1 // pred_region
      _
    $region13: #{tpu_custom_call.1} parent=1 // pred_fallthru
      _
    // Predicated region
    $region14: #{tpu_custom_call.1} parent=1 // pred_check
      _
    $region15: #{tpu_custom_call.1} parent=1 // pred_check_branch
      %20 = sbr.rel (0) target = $region17
    $region16: #{tpu_custom_call.1} parent=1 // pred_region
      _
    $region17: #{tpu_custom_call.1} parent=1 // pred_fallthru
      _
    // Predicated region
    $region18: #{tpu_custom_call.1} parent=1 // pred_check
      _
    $region19: #{tpu_custom_call.1} parent=1 // pred_check_branch
      %22 = sbr.rel (0) target = $region21
    $region20: #{tpu_custom_call.1} parent=1 // pred_region
      _
    $region21: #{tpu_custom_call.1} parent=1 // pred_fallthru
      _
    // Predicated region
    $region22: #{tpu_custom_call.1} parent=1 // pred_check
      _
    $region23: #{tpu_custom_call.1} parent=1 // pred_check_branch
      %24 = sbr.rel (0) target = $region25
    $region24: #{tpu_custom_call.1} parent=1 // pred_region
      _
    $region25: #{tpu_custom_call.1} parent=1 // pred_fallthru
      _
    // Predicated region
    $region26: #{tpu_custom_call.1} parent=1 // pred_check
      _
    $region27: #{tpu_custom_call.1} parent=1 // pred_check_branch
      %26 = sbr.rel (0) target = $region29
    $region28: #{tpu_custom_call.1} parent=1 // pred_region
      _
    $region29: #{tpu_custom_call.1} parent=1 // pred_fallthru
      _
    %v28 = vld [vmem:[%s0] sm:$0xff]
    %v29 = vld [vmem:[%s0 + $0x8] sm:$0xff]
    %v30 = vld [vmem:[%s0 + $0x10] sm:$0xff]
    %v31 = vld [vmem:[%s0 + $0x18] sm:$0xff]
    %v32 = vld [vmem:[%s0 + $0x20] sm:$0xff]
    %v33 = vld [vmem:[%s0 + $0x28] sm:$0xff]
    %v34 = vld [vmem:[%s0 + $0x30] sm:$0xff]
    %v35 = vld [vmem:[%s0 + $0x38] sm:$0xff]
    %v36 = vld [vmem:[%s1] sm:$0xf]
    %v37 = vld [vmem:[%s1 + $0x4] sm:$0xf]
    %v38 = vld [vmem:[%s1 + $0x8] sm:$0xf]
    %v39 = vld [vmem:[%s1 + $0xc] sm:$0xf]
    %v40 = vld [vmem:[%s1 + $0x10] sm:$0xf]
    %v41 = vld [vmem:[%s1 + $0x14] sm:$0xf]
    %v42 = vld [vmem:[%s1 + $0x18] sm:$0xf]
    %v43 = vld [vmem:[%s1 + $0x1c] sm:$0xf]
    %v44 = vld [vmem:[%s1 + $0x20] sm:$0xf]
    %v45 = vld [vmem:[%s1 + $0x24] sm:$0xf]
    %v46 = vld [vmem:[%s1 + $0x28] sm:$0xf]
    %v47 = vld [vmem:[%s1 + $0x2c] sm:$0xf]
    %v48 = vld [vmem:[%s1 + $0x30] sm:$0xf]
    %v49 = vld [vmem:[%s1 + $0x34] sm:$0xf]
    %v50 = vld [vmem:[%s1 + $0x38] sm:$0xf]
    %v51 = vld [vmem:[%s1 + $0x3c] sm:$0xf]
    %v52 = vld [vmem:[%s1 + $0x40] sm:$0xf]
    %v53 = vld [vmem:[%s1 + $0x44] sm:$0xf]
    %v54 = vld [vmem:[%s1 + $0x48] sm:$0xf]
    %v55 = vld [vmem:[%s1 + $0x4c] sm:$0xf]
    %v56 = vld [vmem:[%s1 + $0x50] sm:$0xf]
    %v57 = vld [vmem:[%s1 + $0x54] sm:$0xf]
    %v58 = vld [vmem:[%s1 + $0x58] sm:$0xf]
    %v59 = vld [vmem:[%s1 + $0x5c] sm:$0xf]
    %v60 = vld [vmem:[%s1 + $0x60] sm:$0xf]
    %v61 = vld [vmem:[%s1 + $0x64] sm:$0xf]
    %v62 = vld [vmem:[%s1 + $0x68] sm:$0xf]
    %v63 = vld [vmem:[%s1 + $0x6c] sm:$0xf]
    %v64 = vld [vmem:[%s1 + $0x70] sm:$0xf]
    %v65 = vld [vmem:[%s1 + $0x74] sm:$0xf]
    %v66 = vld [vmem:[%s1 + $0x78] sm:$0xf]
    %v67 = vld [vmem:[%s1 + $0x7c] sm:$0xf]
    %v68 = vld [vmem:[%s1 + $0x80] sm:$0xf]
    %v69 = vld [vmem:[%s1 + $0x84] sm:$0xf]
    %v70 = vld [vmem:[%s1 + $0x88] sm:$0xf]
    %v71 = vld [vmem:[%s1 + $0x8c] sm:$0xf]
    %v72 = vld [vmem:[%s1 + $0x90] sm:$0xf]
    %v73 = vld [vmem:[%s1 + $0x94] sm:$0xf]
    %v74 = vld [vmem:[%s1 + $0x98] sm:$0xf]
    %v75 = vld [vmem:[%s1 + $0x9c] sm:$0xf]
    %v76 = vld [vmem:[%s1 + $0xa0] sm:$0xf]
    %v77 = vld [vmem:[%s1 + $0xa4] sm:$0xf]
    %v78 = vld [vmem:[%s1 + $0xa8] sm:$0xf]
    %v79 = vld [vmem:[%s1 + $0xac] sm:$0xf]
    %v80 = vld [vmem:[%s1 + $0xb0] sm:$0xf]
    %v81 = vld [vmem:[%s1 + $0xb4] sm:$0xf]
    %v82 = vld [vmem:[%s1 + $0xb8] sm:$0xf]
    %v83 = vld [vmem:[%s1 + $0xbc] sm:$0xf]
    %v84 = vld [vmem:[%s1 + $0xc0] sm:$0xf]
    %v85 = vld [vmem:[%s1 + $0xc4] sm:$0xf]
    %v86 = vld [vmem:[%s1 + $0xc8] sm:$0xf]
    %v87 = vld [vmem:[%s1 + $0xcc] sm:$0xf]
    %v88 = vld [vmem:[%s1 + $0xd0] sm:$0xf]
    %v89 = vld [vmem:[%s1 + $0xd4] sm:$0xf]
    %v90 = vld [vmem:[%s1 + $0xd8] sm:$0xf]
    %v91 = vld [vmem:[%s1 + $0xdc] sm:$0xf]
    %v92 = vld [vmem:[%s1 + $0xe0] sm:$0xf]
    %v93 = vld [vmem:[%s1 + $0xe4] sm:$0xf]
    %v94 = vld [vmem:[%s1 + $0xe8] sm:$0xf]
    %v95 = vld [vmem:[%s1 + $0xec] sm:$0xf]
    %v96 = vld [vmem:[%s1 + $0xf0] sm:$0xf]
    %v97 = vld [vmem:[%s1 + $0xf4] sm:$0xf]
    %v98 = vld [vmem:[%s1 + $0xf8] sm:$0xf]
    %v99 = vld [vmem:[%s1 + $0xfc] sm:$0xf]
    %v100 = vld [vmem:[%s1 + $0x100] sm:$0xf]
    %v101 = vld [vmem:[%s1 + $0x104] sm:$0xf]
    %v102 = vld [vmem:[%s1 + $0x108] sm:$0xf]
    %v103 = vld [vmem:[%s1 + $0x10c] sm:$0xf]
    %v104 = vld [vmem:[%s1 + $0x110] sm:$0xf]
    %v105 = vld [vmem:[%s1 + $0x114] sm:$0xf]
    %v106 = vld [vmem:[%s1 + $0x118] sm:$0xf]
    %v107 = vld [vmem:[%s1 + $0x11c] sm:$0xf]
    %v108 = vld [vmem:[%s1 + $0x120] sm:$0xf]
    %v109 = vld [vmem:[%s1 + $0x124] sm:$0xf]
    %v110 = vld [vmem:[%s1 + $0x128] sm:$0xf]
    %v111 = vld [vmem:[%s1 + $0x12c] sm:$0xf]
    %v112 = vld [vmem:[%s1 + $0x130] sm:$0xf]
    %v113 = vld [vmem:[%s1 + $0x134] sm:$0xf]
    %v114 = vld [vmem:[%s1 + $0x138] sm:$0xf]
    %v115 = vld [vmem:[%s1 + $0x13c] sm:$0xf]
    %v116 = vld [vmem:[%s1 + $0x140] sm:$0xf]
    %v117 = vld [vmem:[%s1 + $0x144] sm:$0xf]
    %v118 = vld [vmem:[%s1 + $0x148] sm:$0xf]
    %v119 = vld [vmem:[%s1 + $0x14c] sm:$0xf]
    %v120 = vld [vmem:[%s1 + $0x150] sm:$0xf]
    %v121 = vld [vmem:[%s1 + $0x154] sm:$0xf]
    %v122 = vld [vmem:[%s1 + $0x158] sm:$0xf]
    %v123 = vld [vmem:[%s1 + $0x15c] sm:$0xf]
    %v124 = vld [vmem:[%s1 + $0x160] sm:$0xf]
    %v125 = vld [vmem:[%s1 + $0x164] sm:$0xf]
    %v126 = vld [vmem:[%s1 + $0x168] sm:$0xf]
    %v127 = vld [vmem:[%s1 + $0x16c] sm:$0xf]
    %v128 = vld [vmem:[%s1 + $0x170] sm:$0xf]
    %v129 = vld [vmem:[%s1 + $0x174] sm:$0xf]
    %v130 = vld [vmem:[%s1 + $0x178] sm:$0xf]
    %v131 = vld [vmem:[%s1 + $0x17c] sm:$0xf]
    %v132 = vld [vmem:[%s1 + $0x180] sm:$0xf]
    %v133 = vld [vmem:[%s1 + $0x184] sm:$0xf]
    %v134 = vld [vmem:[%s1 + $0x188] sm:$0xf]
    %v135 = vld [vmem:[%s1 + $0x18c] sm:$0xf]
    %v136 = vld [vmem:[%s1 + $0x190] sm:$0xf]
    %v137 = vld [vmem:[%s1 + $0x194] sm:$0xf]
    %v138 = vld [vmem:[%s1 + $0x198] sm:$0xf]
    %v139 = vld [vmem:[%s1 + $0x19c] sm:$0xf]
    %v140 = vld [vmem:[%s1 + $0x1a0] sm:$0xf]
    %v141 = vld [vmem:[%s1 + $0x1a4] sm:$0xf]
    %v142 = vld [vmem:[%s1 + $0x1a8] sm:$0xf]
    %v143 = vld [vmem:[%s1 + $0x1ac] sm:$0xf]
    %v144 = vld [vmem:[%s1 + $0x1b0] sm:$0xf]
    %v145 = vld [vmem:[%s1 + $0x1b4] sm:$0xf]
    %v146 = vld [vmem:[%s1 + $0x1b8] sm:$0xf]
    %v147 = vld [vmem:[%s1 + $0x1bc] sm:$0xf]
    %v148 = vld [vmem:[%s1 + $0x1c0] sm:$0xf]
    %v149 = vld [vmem:[%s1 + $0x1c4] sm:$0xf]
    %v150 = vld [vmem:[%s1 + $0x1c8] sm:$0xf]
    %v151 = vld [vmem:[%s1 + $0x1cc] sm:$0xf]
    %v152 = vld [vmem:[%s1 + $0x1d0] sm:$0xf]
    %v153 = vld [vmem:[%s1 + $0x1d4] sm:$0xf]
    %v154 = vld [vmem:[%s1 + $0x1d8] sm:$0xf]
    %v155 = vld [vmem:[%s1 + $0x1dc] sm:$0xf]
    %v156 = vld [vmem:[%s1 + $0x1e0] sm:$0xf]
    %v157 = vld [vmem:[%s1 + $0x1e4] sm:$0xf]
    %v158 = vld [vmem:[%s1 + $0x1e8] sm:$0xf]
    %v159 = vld [vmem:[%s1 + $0x1ec] sm:$0xf]
    %v160 = vld [vmem:[%s1 + $0x1f0] sm:$0xf]
    %v161 = vld [vmem:[%s1 + $0x1f4] sm:$0xf]
    %v162 = vld [vmem:[%s1 + $0x1f8] sm:$0xf]
    %v163 = vld [vmem:[%s1 + $0x1fc] sm:$0xf]
    %v164 = vld [vmem:[%s2] sm:$0x1]
    %v166 = vperm.slane %v164, 0
    %v176 = vunpack.c.l.b16 %v28
    %v177 = vunpack.c.h.b16 %v28
    %v178 = vunpack.c.l.b16 %v29
    %v179 = vunpack.c.h.b16 %v29
    %v180 = vunpack.c.l.b16 %v30
    %v181 = vunpack.c.h.b16 %v30
    %v182 = vunpack.c.l.b16 %v31
    %v183 = vunpack.c.h.b16 %v31
    %v184 = vunpack.c.l.b16 %v32
    %v185 = vunpack.c.h.b16 %v32
    %v186 = vunpack.c.l.b16 %v33
    %v187 = vunpack.c.h.b16 %v33
    %v188 = vunpack.c.l.b16 %v34
    %v189 = vunpack.c.h.b16 %v34
    %v190 = vunpack.c.l.b16 %v35
    %v191 = vunpack.c.h.b16 %v35
    %v192 = vpack.c.b16 %v184, %v176
    %v193 = vpack.c.b16 %v185, %v177
    %v194 = vpack.c.b16 %v186, %v178
    %v195 = vpack.c.b16 %v187, %v179
    %v196 = vpack.c.b16 %v188, %v180
    %v197 = vpack.c.b16 %v189, %v181
    %v198 = vpack.c.b16 %v190, %v182
    %v199 = vpack.c.b16 %v191, %v183
    %v336 = vunpack.c.l.b16 %v36
    %v337 = vunpack.c.l.b16 %v37
    %v338 = vunpack.c.l.b16 %v38
    %v339 = vunpack.c.l.b16 %v39
    %v340 = vunpack.c.l.b16 %v40
    %v341 = vunpack.c.l.b16 %v41
    %v342 = vunpack.c.l.b16 %v42
    %v343 = vunpack.c.l.b16 %v43
    %v344 = vunpack.c.l.b16 %v44
    %v345 = vunpack.c.l.b16 %v45
    %v346 = vunpack.c.l.b16 %v46
    %v347 = vunpack.c.l.b16 %v47
    %v348 = vunpack.c.l.b16 %v48
    %v349 = vunpack.c.l.b16 %v49
    %v350 = vunpack.c.l.b16 %v50
    %v351 = vunpack.c.l.b16 %v51
    %v352 = vunpack.c.l.b16 %v52
    %v353 = vunpack.c.l.b16 %v53
    %v354 = vunpack.c.l.b16 %v54
    %v355 = vunpack.c.l.b16 %v55
    %v356 = vunpack.c.l.b16 %v56
    %v357 = vunpack.c.l.b16 %v57
    %v358 = vunpack.c.l.b16 %v58
    %v359 = vunpack.c.l.b16 %v59
    %v360 = vunpack.c.l.b16 %v60
    %v361 = vunpack.c.l.b16 %v61
    %v362 = vunpack.c.l.b16 %v62
    %v363 = vunpack.c.l.b16 %v63
    %v364 = vunpack.c.l.b16 %v64
    %v365 = vunpack.c.l.b16 %v65
    %v366 = vunpack.c.l.b16 %v66
    %v367 = vunpack.c.l.b16 %v67
    %v368 = vunpack.c.l.b16 %v68
    %v369 = vunpack.c.l.b16 %v69
    %v370 = vunpack.c.l.b16 %v70
    %v371 = vunpack.c.l.b16 %v71
    %v372 = vunpack.c.l.b16 %v72
    %v373 = vunpack.c.l.b16 %v73
    %v374 = vunpack.c.l.b16 %v74
    %v375 = vunpack.c.l.b16 %v75
    %v376 = vunpack.c.l.b16 %v76
    %v377 = vunpack.c.l.b16 %v77
    %v378 = vunpack.c.l.b16 %v78
    %v379 = vunpack.c.l.b16 %v79
    %v380 = vunpack.c.l.b16 %v80
    %v381 = vunpack.c.l.b16 %v81
    %v382 = vunpack.c.l.b16 %v82
    %v383 = vunpack.c.l.b16 %v83
    %v384 = vunpack.c.l.b16 %v84
    %v385 = vunpack.c.l.b16 %v85
    %v386 = vunpack.c.l.b16 %v86
    %v387 = vunpack.c.l.b16 %v87
    %v388 = vunpack.c.l.b16 %v88
    %v389 = vunpack.c.l.b16 %v89
    %v390 = vunpack.c.l.b16 %v90
    %v391 = vunpack.c.l.b16 %v91
    %v392 = vunpack.c.l.b16 %v92
    %v393 = vunpack.c.l.b16 %v93
    %v394 = vunpack.c.l.b16 %v94
    %v395 = vunpack.c.l.b16 %v95
    %v396 = vunpack.c.l.b16 %v96
    %v397 = vunpack.c.l.b16 %v97
    %v398 = vunpack.c.l.b16 %v98
    %v399 = vunpack.c.l.b16 %v99
    %v400 = vunpack.c.l.b16 %v100
    %v401 = vunpack.c.l.b16 %v101
    %v402 = vunpack.c.l.b16 %v102
    %v403 = vunpack.c.l.b16 %v103
    %v404 = vunpack.c.l.b16 %v104
    %v405 = vunpack.c.l.b16 %v105
    %v406 = vunpack.c.l.b16 %v106
    %v407 = vunpack.c.l.b16 %v107
    %v408 = vunpack.c.l.b16 %v108
    %v409 = vunpack.c.l.b16 %v109
    %v410 = vunpack.c.l.b16 %v110
    %v411 = vunpack.c.l.b16 %v111
    %v412 = vunpack.c.l.b16 %v112
    %v413 = vunpack.c.l.b16 %v113
    %v414 = vunpack.c.l.b16 %v114
    %v415 = vunpack.c.l.b16 %v115
    %v416 = vunpack.c.l.b16 %v116
    %v417 = vunpack.c.l.b16 %v117
    %v418 = vunpack.c.l.b16 %v118
    %v419 = vunpack.c.l.b16 %v119
    %v420 = vunpack.c.l.b16 %v120
    %v421 = vunpack.c.l.b16 %v121
    %v422 = vunpack.c.l.b16 %v122
    %v423 = vunpack.c.l.b16 %v123
    %v424 = vunpack.c.l.b16 %v124
    %v425 = vunpack.c.l.b16 %v125
    %v426 = vunpack.c.l.b16 %v126
    %v427 = vunpack.c.l.b16 %v127
    %v428 = vunpack.c.l.b16 %v128
    %v429 = vunpack.c.l.b16 %v129
    %v430 = vunpack.c.l.b16 %v130
    %v431 = vunpack.c.l.b16 %v131
    %v432 = vunpack.c.l.b16 %v132
    %v433 = vunpack.c.l.b16 %v133
    %v434 = vunpack.c.l.b16 %v134
    %v435 = vunpack.c.l.b16 %v135
    %v436 = vunpack.c.l.b16 %v136
    %v437 = vunpack.c.l.b16 %v137
    %v438 = vunpack.c.l.b16 %v138
    %v439 = vunpack.c.l.b16 %v139
    %v440 = vunpack.c.l.b16 %v140
    %v441 = vunpack.c.l.b16 %v141
    %v442 = vunpack.c.l.b16 %v142
    %v443 = vunpack.c.l.b16 %v143
    %v444 = vunpack.c.l.b16 %v144
    %v445 = vunpack.c.l.b16 %v145
    %v446 = vunpack.c.l.b16 %v146
    %v447 = vunpack.c.l.b16 %v147
    %v448 = vunpack.c.l.b16 %v148
    %v449 = vunpack.c.l.b16 %v149
    %v450 = vunpack.c.l.b16 %v150
    %v451 = vunpack.c.l.b16 %v151
    %v452 = vunpack.c.l.b16 %v152
    %v453 = vunpack.c.l.b16 %v153
    %v454 = vunpack.c.l.b16 %v154
    %v455 = vunpack.c.l.b16 %v155
    %v456 = vunpack.c.l.b16 %v156
    %v457 = vunpack.c.l.b16 %v157
    %v458 = vunpack.c.l.b16 %v158
    %v459 = vunpack.c.l.b16 %v159
    %v460 = vunpack.c.l.b16 %v160
    %v461 = vunpack.c.l.b16 %v161
    %v462 = vunpack.c.l.b16 %v162
    %v463 = vunpack.c.l.b16 %v163
    %v464 = vpack.c.b16 %v337, %v336
    %v465 = vpack.c.b16 %v339, %v338
    %v466 = vpack.c.b16 %v341, %v340
    %v467 = vpack.c.b16 %v343, %v342
    %v468 = vpack.c.b16 %v345, %v344
    %v469 = vpack.c.b16 %v347, %v346
    %v470 = vpack.c.b16 %v349, %v348
    %v471 = vpack.c.b16 %v351, %v350
    %v472 = vpack.c.b16 %v353, %v352
    %v473 = vpack.c.b16 %v355, %v354
    %v474 = vpack.c.b16 %v357, %v356
    %v475 = vpack.c.b16 %v359, %v358
    %v476 = vpack.c.b16 %v361, %v360
    %v477 = vpack.c.b16 %v363, %v362
    %v478 = vpack.c.b16 %v365, %v364
    %v479 = vpack.c.b16 %v367, %v366
    %v480 = vpack.c.b16 %v369, %v368
    %v481 = vpack.c.b16 %v371, %v370
    %v482 = vpack.c.b16 %v373, %v372
    %v483 = vpack.c.b16 %v375, %v374
    %v484 = vpack.c.b16 %v377, %v376
    %v485 = vpack.c.b16 %v379, %v378
    %v486 = vpack.c.b16 %v381, %v380
    %v487 = vpack.c.b16 %v383, %v382
    %v488 = vpack.c.b16 %v385, %v384
    %v489 = vpack.c.b16 %v387, %v386
    %v490 = vpack.c.b16 %v389, %v388
    %v491 = vpack.c.b16 %v391, %v390
    %v492 = vpack.c.b16 %v393, %v392
    %v493 = vpack.c.b16 %v395, %v394
    %v494 = vpack.c.b16 %v397, %v396
    %v495 = vpack.c.b16 %v399, %v398
    %v496 = vpack.c.b16 %v401, %v400
    %v497 = vpack.c.b16 %v403, %v402
    %v498 = vpack.c.b16 %v405, %v404
    %v499 = vpack.c.b16 %v407, %v406
    %v500 = vpack.c.b16 %v409, %v408
    %v501 = vpack.c.b16 %v411, %v410
    %v502 = vpack.c.b16 %v413, %v412
    %v503 = vpack.c.b16 %v415, %v414
    %v504 = vpack.c.b16 %v417, %v416
    %v505 = vpack.c.b16 %v419, %v418
    %v506 = vpack.c.b16 %v421, %v420
    %v507 = vpack.c.b16 %v423, %v422
    %v508 = vpack.c.b16 %v425, %v424
    %v509 = vpack.c.b16 %v427, %v426
    %v510 = vpack.c.b16 %v429, %v428
    %v511 = vpack.c.b16 %v431, %v430
    %v512 = vpack.c.b16 %v433, %v432
    %v513 = vpack.c.b16 %v435, %v434
    %v514 = vpack.c.b16 %v437, %v436
    %v515 = vpack.c.b16 %v439, %v438
    %v516 = vpack.c.b16 %v441, %v440
    %v517 = vpack.c.b16 %v443, %v442
    %v518 = vpack.c.b16 %v445, %v444
    %v519 = vpack.c.b16 %v447, %v446
    %v520 = vpack.c.b16 %v449, %v448
    %v521 = vpack.c.b16 %v451, %v450
    %v522 = vpack.c.b16 %v453, %v452
    %v523 = vpack.c.b16 %v455, %v454
    %v524 = vpack.c.b16 %v457, %v456
    %v525 = vpack.c.b16 %v459, %v458
    %v526 = vpack.c.b16 %v461, %v460
    %v527 = vpack.c.b16 %v463, %v462
    %592 = vmatpush.bf16.msra.mxu0 %v471
    %593 = vmatpush.bf16.msra.mxu0 %v470
    %594 = vmatpush.bf16.msra.mxu0 %v469
    %595 = vmatpush.bf16.msra.mxu0 %v468
    %596 = vmatpush.bf16.msra.mxu0 %v467
    %597 = vmatpush.bf16.msra.mxu0 %v466
    %598 = vmatpush.bf16.msra.mxu0 %v465
    %599 = vmatpush.bf16.msra.mxu0 %v464
    %600 = vmatmul.bf16.gmra.mxu0 %v192
    %v601 = vpop.f32.mrf.mxu0
    %v602 = vadd.f32 %v166, %v601
    %v603 = vpop.f32.mrf.mxu0
    %v604 = vadd.f32 %v166, %v603
    %605 = vdwg.mxu0
    %606 = vmatpush.bf16.msra.mxu0 %v479
    %607 = vmatpush.bf16.msra.mxu0 %v478
    %608 = vmatpush.bf16.msra.mxu0 %v477
    %609 = vmatpush.bf16.msra.mxu0 %v476
    %610 = vmatpush.bf16.msra.mxu0 %v475
    %611 = vmatpush.bf16.msra.mxu0 %v474
    %612 = vmatpush.bf16.msra.mxu0 %v473
    %613 = vmatpush.bf16.msra.mxu0 %v472
    %614 = vmatmul.bf16.gmra.mxu0 %v193
    %v615 = vpop.f32.mrf.mxu0
    %v616 = vadd.f32 %v602, %v615
    %v617 = vpop.f32.mrf.mxu0
    %v618 = vadd.f32 %v604, %v617
    %619 = vdwg.mxu0
    %620 = vmatpush.bf16.msra.mxu0 %v487
    %621 = vmatpush.bf16.msra.mxu0 %v486
    %622 = vmatpush.bf16.msra.mxu0 %v485
    %623 = vmatpush.bf16.msra.mxu0 %v484
    %624 = vmatpush.bf16.msra.mxu0 %v483
    %625 = vmatpush.bf16.msra.mxu0 %v482
    %626 = vmatpush.bf16.msra.mxu0 %v481
    %627 = vmatpush.bf16.msra.mxu0 %v480
    %628 = vmatmul.bf16.gmra.mxu0 %v194
    %v629 = vpop.f32.mrf.mxu0
    %v630 = vadd.f32 %v616, %v629
    %v631 = vpop.f32.mrf.mxu0
    %v632 = vadd.f32 %v618, %v631
    %633 = vdwg.mxu0
    %634 = vmatpush.bf16.msra.mxu0 %v495
    %635 = vmatpush.bf16.msra.mxu0 %v494
    %636 = vmatpush.bf16.msra.mxu0 %v493
    %637 = vmatpush.bf16.msra.mxu0 %v492
    %638 = vmatpush.bf16.msra.mxu0 %v491
    %639 = vmatpush.bf16.msra.mxu0 %v490
    %640 = vmatpush.bf16.msra.mxu0 %v489
    %641 = vmatpush.bf16.msra.mxu0 %v488
    %642 = vmatmul.bf16.gmra.mxu0 %v195
    %v643 = vpop.f32.mrf.mxu0
    %v644 = vadd.f32 %v630, %v643
    %v645 = vpop.f32.mrf.mxu0
    %v646 = vadd.f32 %v632, %v645
    %647 = vdwg.mxu0
    %648 = vmatpush.bf16.msra.mxu0 %v503
    %649 = vmatpush.bf16.msra.mxu0 %v502
    %650 = vmatpush.bf16.msra.mxu0 %v501
    %651 = vmatpush.bf16.msra.mxu0 %v500
    %652 = vmatpush.bf16.msra.mxu0 %v499
    %653 = vmatpush.bf16.msra.mxu0 %v498
    %654 = vmatpush.bf16.msra.mxu0 %v497
    %655 = vmatpush.bf16.msra.mxu0 %v496
    %656 = vmatmul.bf16.gmra.mxu0 %v196
    %v657 = vpop.f32.mrf.mxu0
    %v658 = vadd.f32 %v644, %v657
    %v659 = vpop.f32.mrf.mxu0
    %v660 = vadd.f32 %v646, %v659
    %661 = vdwg.mxu0
    %662 = vmatpush.bf16.msra.mxu0 %v511
    %663 = vmatpush.bf16.msra.mxu0 %v510
    %664 = vmatpush.bf16.msra.mxu0 %v509
    %665 = vmatpush.bf16.msra.mxu0 %v508
    %666 = vmatpush.bf16.msra.mxu0 %v507
    %667 = vmatpush.bf16.msra.mxu0 %v506
    %668 = vmatpush.bf16.msra.mxu0 %v505
    %669 = vmatpush.bf16.msra.mxu0 %v504
    %670 = vmatmul.bf16.gmra.mxu0 %v197
    %v671 = vpop.f32.mrf.mxu0
    %v672 = vadd.f32 %v658, %v671
    %v673 = vpop.f32.mrf.mxu0
    %v674 = vadd.f32 %v660, %v673
    %675 = vdwg.mxu0
    %676 = vmatpush.bf16.msra.mxu0 %v519
    %677 = vmatpush.bf16.msra.mxu0 %v518
    %678 = vmatpush.bf16.msra.mxu0 %v517
    %679 = vmatpush.bf16.msra.mxu0 %v516
    %680 = vmatpush.bf16.msra.mxu0 %v515
    %681 = vmatpush.bf16.msra.mxu0 %v514
    %682 = vmatpush.bf16.msra.mxu0 %v513
    %683 = vmatpush.bf16.msra.mxu0 %v512
    %684 = vmatmul.bf16.gmra.mxu0 %v198
    %v685 = vpop.f32.mrf.mxu0
    %v686 = vadd.f32 %v672, %v685
    %v687 = vpop.f32.mrf.mxu0
    %v688 = vadd.f32 %v674, %v687
    %689 = vdwg.mxu0
    %690 = vmatpush.bf16.msra.mxu0 %v527
    %691 = vmatpush.bf16.msra.mxu0 %v526
    %692 = vmatpush.bf16.msra.mxu0 %v525
    %693 = vmatpush.bf16.msra.mxu0 %v524
    %694 = vmatpush.bf16.msra.mxu0 %v523
    %695 = vmatpush.bf16.msra.mxu0 %v522
    %696 = vmatpush.bf16.msra.mxu0 %v521
    %697 = vmatpush.bf16.msra.mxu0 %v520
    %698 = vmatmul.bf16.gmra.mxu0 %v199
    %v699 = vpop.f32.mrf.mxu0
    %v700 = vadd.f32 %v686, %v699
    %v701 = vpop.f32.mrf.mxu0
    %v702 = vadd.f32 %v688, %v701
    %703 = vdwg.mxu0
    %v704 = vmax.f32 %v700, 0.0
    %v705 = vmax.f32 %v702, 0.0
    %v706 = vpack.c.bf16 %v705, %v704
    %v707 = vld [vmem:[%s3] sm:$0xf]
    %v708 = vld [vmem:[%s4] sm:$0x1]
    %v710 = vperm.slane %v708, 0
    %vm712 = vcmask 64512
    %v714 = vsel %vm712, %v706, 0
    %vm716 = vcmask 1043456
    %v718 = vsel %vm716, %v707, 0
    %720 = vmatpush.bf16.msra.mxu0 0
    %721 = vmatpush.bf16.msra.mxu0 0
    %722 = vmatpush.bf16.msra.mxu0 0
    %723 = vmatpush.bf16.msra.mxu0 0
    %724 = vmatpush.bf16.msra.mxu0 0
    %725 = vmatpush.bf16.msra.mxu0 0
    %726 = vmatpush.bf16.msra.mxu0 0
    %727 = vmatpush.bf16.msra.mxu0 %v718
    %728 = vmatmul.bf16.gmra.mxu0 %v714
    %v729 = vpop.f32.mrf.mxu0
    %v730 = vadd.f32 %v710, %v729
    %v731 = vpop.f32.mrf.mxu0
    %v732 = vadd.f32 %v710, %v731
    %733 = vdwg.mxu0
    %v734 = vmax.f32 %v730, 0.0
    %v735 = vmax.f32 %v732, 0.0
    %v736 = vpack.c.bf16 %v735, %v734
    %v737 = vld [vmem:[%s5] sm:$0xf]
    %v738 = vld [vmem:[%s6] sm:$0x1]
    %v740 = vperm.slane %v738, 0
    %v743 = vsel %vm712, %v736, 0
    %v746 = vsel %vm716, %v737, 0
    %748 = vmatpush.bf16.msra.mxu0 0
    %749 = vmatpush.bf16.msra.mxu0 0
    %750 = vmatpush.bf16.msra.mxu0 0
    %751 = vmatpush.bf16.msra.mxu0 0
    %752 = vmatpush.bf16.msra.mxu0 0
    %753 = vmatpush.bf16.msra.mxu0 0
    %754 = vmatpush.bf16.msra.mxu0 0
    %755 = vmatpush.bf16.msra.mxu0 %v746
    %756 = vmatmul.bf16.gmra.mxu0 %v743
    %v757 = vpop.f32.mrf.mxu0
    %v758 = vadd.f32 %v740, %v757
    %v759 = vpop.f32.mrf.mxu0
    %v760 = vadd.f32 %v740, %v759
    %761 = vdwg.mxu0
    %vm762 = vcmask 80896
    %763 = vst.msk [vmem:[#allocation2] sm:$0xff] %vm762, %v758
    %764 = vst.msk [vmem:[#allocation2 + $0x8] sm:$0xff] %vm762, %v760
    // Predicated region
    $region30: #{tpu_custom_call.1} parent=1 // pred_check
      _
    $region31: #{tpu_custom_call.1} parent=1 // pred_check_branch
      %766 = sbr.rel (0) target = $region33
    $region32: #{tpu_custom_call.1} parent=1 // pred_region
      %768 = vsyncadd [#allocation3], 0
      %s769 = sshll.u32 [#allocation2], 4
      %s770 = int_to_ptr.vmem [resolvable:$true] %s769
      %s771 = sshll.u32 %s7, 4
      %s772 = int_to_ptr.hbm [resolvable:$true] %s771
      %777 = dma.vmem_to_hbm [thread:$0]  %s770, 256, %s772, [#allocation3], 128, 128, 8
    $region33: #{tpu_custom_call.1} parent=1 // pred_fallthru
      _
    // Predicated region
    $region34: #{tpu_custom_call.1} parent=1 // pred_check
      _
    $region35: #{tpu_custom_call.1} parent=1 // pred_check_branch
      %779 = sbr.rel (0) target = $region37
    $region36: #{tpu_custom_call.1} parent=1 // pred_region
      %781 = dma.done [#allocation3], 256
    $region37: #{tpu_custom_call.1} parent=1 // pred_fallthru
      _
    %782 = vsyncpa [#allocation3], 1

</llo_original>
